<compile_context>
chip_gen: v6e
topology: v6e:2x2x1
jax: 0.10.0
libtpu: 0.0.40
codegen_flags: <defaults>
</compile_context>

<pallas_src>
import jax
import jax.numpy as jnp
from jax.experimental import pallas as pl
from jax.experimental.pallas import tpu as pltpu

LANE = 128          # TPU lane width: hidden (contraction) dim padded to this
HIDDEN = 40         # fixed hidden size of the module
VMEM_LIMIT = 32 * 1024 * 1024   # safe on v5e/v6e/v7x


def _round_up(n, m):
    return (n + m - 1) // m * m


def slp_kernel(x_ref, w1_ref, b1_ref, w2_ref, b2_ref, o_ref):
    # hidden = relu(x @ W1 + b1)   -- f32 accumulation on the MXU.
    h = jnp.dot(x_ref[...], w1_ref[...], preferred_element_type=jnp.float32)
    h = jnp.maximum(h + b1_ref[...], 0.0)          # b1 is (1, H_pad), broadcasts
    # out = hidden @ W2 + b2       -- second matmul at N = d_out (un-padded).
    y = jnp.dot(h.astype(w2_ref.dtype), w2_ref[...],
                preferred_element_type=jnp.float32)
    o_ref[...] = (y + b2_ref[...]).astype(o_ref.dtype)


def prepare_params(w1, b1, w2, b2, *, compute_dtype=jnp.float32):
    """Pad the hidden dim to 128 lanes ONCE, outside the kernel.

    Output dim is NOT padded (per perf review).  compute_dtype=jnp.bfloat16
    stores the matmul operands in bf16 (biases stay f32).
    """
    d_in, h = w1.shape
    d_out = w2.shape[1]
    h_pad = _round_up(h, LANE)
    w1p = jnp.pad(w1, ((0, 0), (0, h_pad - h))).astype(compute_dtype)
    b1p = jnp.pad(b1.reshape(1, h), ((0, 0), (0, h_pad - h))).astype(jnp.float32)
    w2p = jnp.pad(w2, ((0, h_pad - h), (0, 0))).astype(compute_dtype)
    b2p = b2.reshape(1, d_out).astype(jnp.float32)
    return w1p, b1p, w2p, b2p, d_out


def slp_forward(x, w1p, b1p, w2p, b2p, d_out, *, batch_tile=4096):
    """x: [B, D_in]; padded params from prepare_params; returns [B, d_out] f32."""
    B, d_in = x.shape
    h_pad = w1p.shape[1]
    x = x.astype(w1p.dtype)     # bf16 path halves the dominant x HBM read

    flops = 2 * B * d_in * h_pad + 2 * B * h_pad * d_out
    bytes_accessed = (x.size * x.dtype.itemsize
                      + w1p.size * w1p.dtype.itemsize
                      + b1p.size * b1p.dtype.itemsize
                      + w2p.size * w2p.dtype.itemsize
                      + b2p.size * b2p.dtype.itemsize
                      + B * d_out * 4)
    cost = pl.CostEstimate(flops=flops, transcendentals=0,
                           bytes_accessed=bytes_accessed)

    if B <= batch_tile:
        # Small/medium batch: no grid -- every operand lives whole in VMEM,
        # kernel runs once, zero per-step overhead.
        return pl.pallas_call(
            slp_kernel,
            out_shape=jax.ShapeDtypeStruct((B, d_out), jnp.float32),
            cost_estimate=cost,
            compiler_params=pltpu.CompilerParams(
                vmem_limit_bytes=VMEM_LIMIT),
        )(x, w1p, b1p, w2p, b2p)

    # Large batch: tile the batch axis.  Weights/biases use constant
    # index_maps so they stay VMEM-resident across the grid; the batch axis
    # is 'parallel' so v7x's two TensorCores split it.
    tb = batch_tile
    b_pad = _round_up(B, tb)
    if b_pad != B:
        x = jnp.pad(x, ((0, b_pad - B), (0, 0)))
    y = pl.pallas_call(
        slp_kernel,
        out_shape=jax.ShapeDtypeStruct((b_pad, d_out), jnp.float32),
        grid=(b_pad // tb,),
        in_specs=[
            pl.BlockSpec((tb, d_in), lambda i: (i, 0)),
            pl.BlockSpec(w1p.shape, lambda i: (0, 0)),
            pl.BlockSpec(b1p.shape, lambda i: (0, 0)),
            pl.BlockSpec(w2p.shape, lambda i: (0, 0)),
            pl.BlockSpec(b2p.shape, lambda i: (0, 0)),
        ],
        out_specs=pl.BlockSpec((tb, d_out), lambda i: (i, 0)),
        compiler_params=pltpu.CompilerParams(
            dimension_semantics=("parallel",),
            vmem_limit_bytes=VMEM_LIMIT),
        cost_estimate=cost,
    )(x, w1p, b1p, w2p, b2p)
    return y[:B]


def init_params(key, d_in, hidden, d_out):
    """Deterministic init mimicking torch.nn.Linear (uniform +/- 1/sqrt(fan_in))."""
    k1, k2, k3, k4 = jax.random.split(key, 4)
    lim1 = 1.0 / jnp.sqrt(jnp.float32(d_in))
    lim2 = 1.0 / jnp.sqrt(jnp.float32(hidden))
    w1 = jax.random.uniform(k1, (d_in, hidden), jnp.float32, -lim1, lim1)
    b1 = jax.random.uniform(k2, (hidden,), jnp.float32, -lim1, lim1)
    w2 = jax.random.uniform(k3, (hidden, d_out), jnp.float32, -lim2, lim2)
    b2 = jax.random.uniform(k4, (d_out,), jnp.float32, -lim2, lim2)
    return w1, b1, w2, b2


if __name__ == "__main__":
    key = jax.random.PRNGKey(0)
    kx, kp, kx2 = jax.random.split(key, 3)

    # Module config: input_shape=(16,), hidden=40 (fixed), output_shape=4
    B, D_IN, D_OUT = 8, 16, 4
    w1, b1, w2, b2 = init_params(kp, D_IN, HIDDEN, D_OUT)

    def ref_fn(xx):
        return jnp.maximum(xx @ w1 + b1[None, :], 0.0) @ w2 + b2[None, :]

    # --- f32, small-batch (gridless) path ---
    w1p, b1p, w2p, b2p, d_out = prepare_params(w1, b1, w2, b2)
    x = jax.random.normal(kx, (B, D_IN), jnp.float32)
    out = jax.block_until_ready(slp_forward(x, w1p, b1p, w2p, b2p, d_out))
    assert out.shape == (B, D_OUT)
    assert jnp.allclose(out, ref_fn(x), atol=1e-5, rtol=1e-5)

    # --- f32, batch-tiled ('parallel' grid) path, exercised at a tiny tile ---
    B2 = 16
    x2 = jax.random.normal(kx2, (B2, D_IN), jnp.float32)
    out2 = jax.block_until_ready(
        slp_forward(x2, w1p, b1p, w2p, b2p, d_out, batch_tile=8))
    assert out2.shape == (B2, D_OUT)
    assert jnp.allclose(out2, ref_fn(x2), atol=1e-5, rtol=1e-5)

    # --- optional bf16-operand path (MXU-native; f32 accumulate/store) ---
    w1b, b1b, w2b, b2b, _ = prepare_params(w1, b1, w2, b2,
                                           compute_dtype=jnp.bfloat16)
    out3 = jax.block_until_ready(slp_forward(x, w1b, b1b, w2b, b2b, d_out))
    assert out3.shape == (B, D_OUT)
    assert jnp.allclose(out3, ref_fn(x), atol=1e-1, rtol=1e-1)

    print("KERNEL_OK")
</pallas_src>

<mosaic_0001>
module attributes {stable_mosaic.version = 11 : i64} {
  func.func @slp_kernel(%arg0: memref<8x16xf32, #tpu.memory_space<vmem>>, %arg1: memref<16x128xf32, #tpu.memory_space<vmem>>, %arg2: memref<1x128xf32, #tpu.memory_space<vmem>>, %arg3: memref<128x4xf32, #tpu.memory_space<vmem>>, %arg4: memref<1x4xf32, #tpu.memory_space<vmem>>, %arg5: memref<8x4xf32, #tpu.memory_space<vmem>>) attributes {dimension_semantics = [], scalar_prefetch = 0 : i64, scratch_operands = 0 : i64, tpu.core_type = #tpu.core_type<tc>} {
    %c0 = arith.constant 0 : index
    %c0_0 = arith.constant 0 : index
    %0 = vector.load %arg0[%c0, %c0_0] : memref<8x16xf32, #tpu.memory_space<vmem>>, vector<8x16xf32>
    %c0_1 = arith.constant 0 : index
    %c0_2 = arith.constant 0 : index
    %1 = vector.load %arg1[%c0_1, %c0_2] : memref<16x128xf32, #tpu.memory_space<vmem>>, vector<16x128xf32>
    %cst = arith.constant dense<0.000000e+00> : vector<8x128xf32>
    %2 = tpu.matmul %0, %1, %cst {dimension_numbers = #tpu.dot_dimension_numbers<[1], [0], [0], [1], [0, 0, 1, 1], [], []>} : vector<8x16xf32>, vector<16x128xf32>, vector<8x128xf32> -> vector<8x128xf32>
    %c0_3 = arith.constant 0 : index
    %c0_4 = arith.constant 0 : index
    %3 = vector.load %arg2[%c0_3, %c0_4] : memref<1x128xf32, #tpu.memory_space<vmem>>, vector<1x128xf32>
    %4 = vector.broadcast %3 : vector<1x128xf32> to vector<8x128xf32>
    %5 = arith.addf %2, %4 : vector<8x128xf32>
    %cst_5 = arith.constant 0.000000e+00 : f32
    %6 = vector.broadcast %cst_5 : f32 to vector<8x128xf32>
    %7 = arith.maximumf %5, %6 : vector<8x128xf32>
    %c0_6 = arith.constant 0 : index
    %c0_7 = arith.constant 0 : index
    %8 = vector.load %arg3[%c0_6, %c0_7] : memref<128x4xf32, #tpu.memory_space<vmem>>, vector<128x4xf32>
    %cst_8 = arith.constant dense<0.000000e+00> : vector<8x4xf32>
    %9 = tpu.matmul %7, %8, %cst_8 {dimension_numbers = #tpu.dot_dimension_numbers<[1], [0], [0], [1], [0, 0, 1, 1], [], []>} : vector<8x128xf32>, vector<128x4xf32>, vector<8x4xf32> -> vector<8x4xf32>
    %c0_9 = arith.constant 0 : index
    %c0_10 = arith.constant 0 : index
    %10 = vector.load %arg4[%c0_9, %c0_10] : memref<1x4xf32, #tpu.memory_space<vmem>>, vector<1x4xf32>
    %11 = vector.broadcast %10 : vector<1x4xf32> to vector<8x4xf32>
    %12 = arith.addf %9, %11 : vector<8x4xf32>
    %c0_11 = arith.constant 0 : index
    %c0_12 = arith.constant 0 : index
    %13 = vector.load %arg5[%c0_11, %c0_12] : memref<8x4xf32, #tpu.memory_space<vmem>>, vector<8x4xf32>
    tpu.vector_store %arg5[%c0_11, %c0_12], %12 {strides = array<i32>} : memref<8x4xf32, #tpu.memory_space<vmem>>, vector<8x4xf32>,
    return
  }
}

</mosaic_0001>

<llo_original>
// kernel: tpu_custom_call.1
$region0: #{tpu_custom_call.1}
  #allocation0 [shape = 'u32[]', space=smem, size = 0x4, offset = 0x4, fixed_abs, tag = 'smem constant byte address 0x4 - core index']
  #allocation1 [shape = 'u32[144,128]{1,0:T(1,128)}', space=vmem, size = 0x12000, scoped, tag = 'internal scratch']
  %s0 = inlined_call_operand.vmem [shape: f32[8,16], index: 0, kind: input, shape index: {}]
  %s1 = inlined_call_operand.vmem [shape: f32[16,128], index: 1, kind: input, shape index: {}]
  %s2 = inlined_call_operand.vmem [shape: f32[1,128], index: 2, kind: input, shape index: {}]
  %s3 = inlined_call_operand.vmem [shape: f32[128,4], index: 3, kind: input, shape index: {}]
  %s4 = inlined_call_operand.vmem [shape: f32[1,4], index: 4, kind: input, shape index: {}]
  %s5 = inlined_call_operand.vmem [shape: f32[8,4], index: 5, kind: output, shape index: {}]
  %s6 = sld [smem:[#allocation0]]
  $region30: #{tpu_custom_call.1} parent=0
    _
  %s8 = ssub.s32 1, %s6
  %s9 = scalar_select 0, %s8, %s6
  // Predicated region
  $region2: #{tpu_custom_call.1} parent=0 // pred_check
    _
  $region3: #{tpu_custom_call.1} parent=0 // pred_check_branch
    %11 = sbr.rel (0) target = $region5
  $region4: #{tpu_custom_call.1} parent=0 // pred_region
    _
  $region5: #{tpu_custom_call.1} parent=0 // pred_fallthru
    _
  // Predicated region
  $region6: #{tpu_custom_call.1} parent=0 // pred_check
    _
  $region7: #{tpu_custom_call.1} parent=0 // pred_check_branch
    %13 = sbr.rel (0) target = $region9
  $region8: #{tpu_custom_call.1} parent=0 // pred_region
    _
  $region9: #{tpu_custom_call.1} parent=0 // pred_fallthru
    _
  // Predicated region
  $region10: #{tpu_custom_call.1} parent=0 // pred_check
    _
  $region11: #{tpu_custom_call.1} parent=0 // pred_check_branch
    %15 = sbr.rel (0) target = $region13
  $region12: #{tpu_custom_call.1} parent=0 // pred_region
    _
  $region13: #{tpu_custom_call.1} parent=0 // pred_fallthru
    _
  // Predicated region
  $region14: #{tpu_custom_call.1} parent=0 // pred_check
    _
  $region15: #{tpu_custom_call.1} parent=0 // pred_check_branch
    %17 = sbr.rel (0) target = $region17
  $region16: #{tpu_custom_call.1} parent=0 // pred_region
    _
  $region17: #{tpu_custom_call.1} parent=0 // pred_fallthru
    _
  // Predicated region
  $region18: #{tpu_custom_call.1} parent=0 // pred_check
    _
  $region19: #{tpu_custom_call.1} parent=0 // pred_check_branch
    %19 = sbr.rel (0) target = $region21
  $region20: #{tpu_custom_call.1} parent=0 // pred_region
    _
  $region21: #{tpu_custom_call.1} parent=0 // pred_fallthru
    _
  %v20 = vld [vmem:[%s0] sm:$0xff]
  %v21 = vld [vmem:[%s1] sm:$0xff]
  %v22 = vld [vmem:[%s1 + $0x8] sm:$0xff]
  %v23 = vld [vmem:[%s2] sm:$0x1]
  %v25 = vlaneseq
  %v26 = vshrl.u32 %v25, 7
  %v27 = vsub.s32 0, %v26
  %v28 = vrot.slane %v23, %v27
  %vm30 = vcmask 130048
  %v32 = vsel %vm30, %v20, 0
  %34 = vmatprep.subr.mxu0 0.0
  %35 = vmatpush1.msra.mxu0 0.0
  %36 = vmatprep.subr.mxu0 0.0
  %37 = vmatpush1.msra.mxu0 0.0
  %38 = vmatprep.subr.mxu0 0.0
  %39 = vmatpush1.msra.mxu0 0.0
  %40 = vmatprep.subr.mxu0 0.0
  %41 = vmatpush1.msra.mxu0 0.0
  %42 = vmatprep.subr.mxu0 0.0
  %43 = vmatpush1.msra.mxu0 0.0
  %44 = vmatprep.subr.mxu0 0.0
  %45 = vmatpush1.msra.mxu0 0.0
  %46 = vmatprep.subr.mxu0 0.0
  %47 = vmatpush1.msra.mxu0 0.0
  %48 = vmatprep.subr.mxu0 0.0
  %49 = vmatpush1.msra.mxu0 0.0
  %50 = vmatprep.subr.mxu0 0.0
  %51 = vmatpush1.msra.mxu0 0.0
  %52 = vmatprep.subr.mxu0 0.0
  %53 = vmatpush1.msra.mxu0 0.0
  %54 = vmatprep.subr.mxu0 0.0
  %55 = vmatpush1.msra.mxu0 0.0
  %56 = vmatprep.subr.mxu0 0.0
  %57 = vmatpush1.msra.mxu0 0.0
  %58 = vmatprep.subr.mxu0 0.0
  %59 = vmatpush1.msra.mxu0 0.0
  %60 = vmatprep.subr.mxu0 0.0
  %61 = vmatpush1.msra.mxu0 0.0
  %62 = vmatprep.subr.mxu0 0.0
  %63 = vmatpush1.msra.mxu0 %v22
  %64 = vmatprep.subr.mxu0 0.0
  %65 = vmatpush1.msra.mxu0 %v21
  %66 = vmatprep.subr.mxu0 0.0
  %67 = vmatpush2.msra.mxu0 0.0
  %68 = vmatprep.subr.mxu0 0.0
  %69 = vmatpush2.msra.mxu0 0.0
  %70 = vmatprep.subr.mxu0 0.0
  %71 = vmatpush2.msra.mxu0 0.0
  %72 = vmatprep.subr.mxu0 0.0
  %73 = vmatpush2.msra.mxu0 0.0
  %74 = vmatprep.subr.mxu0 0.0
  %75 = vmatpush2.msra.mxu0 0.0
  %76 = vmatprep.subr.mxu0 0.0
  %77 = vmatpush2.msra.mxu0 0.0
  %78 = vmatprep.subr.mxu0 0.0
  %79 = vmatpush2.msra.mxu0 0.0
  %80 = vmatprep.subr.mxu0 0.0
  %81 = vmatpush2.msra.mxu0 0.0
  %82 = vmatprep.subr.mxu0 0.0
  %83 = vmatpush2.msra.mxu0 0.0
  %84 = vmatprep.subr.mxu0 0.0
  %85 = vmatpush2.msra.mxu0 0.0
  %86 = vmatprep.subr.mxu0 0.0
  %87 = vmatpush2.msra.mxu0 0.0
  %88 = vmatprep.subr.mxu0 0.0
  %89 = vmatpush2.msra.mxu0 0.0
  %90 = vmatprep.subr.mxu0 0.0
  %91 = vmatpush2.msra.mxu0 0.0
  %92 = vmatprep.subr.mxu0 0.0
  %93 = vmatpush2.msra.mxu0 0.0
  %94 = vmatprep.subr.mxu0 0.0
  %95 = vmatpush2.msra.mxu0 0.0
  %96 = vmatprep.subr.mxu0 0.0
  %97 = vmatpush2.msra.mxu0 0.0
  %98 = vmatprep.mubr.f32.mxu0 0.0
  %99 = vmatmul.mubr.f32.gmra.mxu0 %v32
  %v100 = vpop.f32.mrf.mxu0
  %v101 = vadd.f32 %v28, %v100
  %v102 = vpop.f32.mrf.mxu0
  %103 = vdwg.mxu0
  %v104 = vmax.f32 %v101, 0.0
  %v105 = vld [vmem:[%s3] sm:$0xff]
  %v106 = vld [vmem:[%s3 + $0x8] sm:$0xff]
  %v107 = vld [vmem:[%s3 + $0x10] sm:$0xff]
  %v108 = vld [vmem:[%s3 + $0x18] sm:$0xff]
  %v109 = vld [vmem:[%s3 + $0x20] sm:$0xff]
  %v110 = vld [vmem:[%s3 + $0x28] sm:$0xff]
  %v111 = vld [vmem:[%s3 + $0x30] sm:$0xff]
  %v112 = vld [vmem:[%s3 + $0x38] sm:$0xff]
  %v113 = vld [vmem:[%s3 + $0x40] sm:$0xff]
  %v114 = vld [vmem:[%s3 + $0x48] sm:$0xff]
  %v115 = vld [vmem:[%s3 + $0x50] sm:$0xff]
  %v116 = vld [vmem:[%s3 + $0x58] sm:$0xff]
  %v117 = vld [vmem:[%s3 + $0x60] sm:$0xff]
  %v118 = vld [vmem:[%s3 + $0x68] sm:$0xff]
  %v119 = vld [vmem:[%s3 + $0x70] sm:$0xff]
  %v120 = vld [vmem:[%s3 + $0x78] sm:$0xff]
  %v121 = vld [vmem:[%s4] sm:$0x1]
  %v123 = vlaneseq
  %v124 = vshrl.u32 %v123, 7
  %v125 = vsub.s32 0, %v124
  %v126 = vrot.slane %v121, %v125
  %128 = vmatprep.subr.mxu0 0.0
  %129 = vmatpush1.msra.mxu0 %v120
  %130 = vmatprep.subr.mxu0 0.0
  %131 = vmatpush1.msra.mxu0 %v119
  %132 = vmatprep.subr.mxu0 0.0
  %133 = vmatpush1.msra.mxu0 %v118
  %134 = vmatprep.subr.mxu0 0.0
  %135 = vmatpush1.msra.mxu0 %v117
  %136 = vmatprep.subr.mxu0 0.0
  %137 = vmatpush1.msra.mxu0 %v116
  %138 = vmatprep.subr.mxu0 0.0
  %139 = vmatpush1.msra.mxu0 %v115
  %140 = vmatprep.subr.mxu0 0.0
  %141 = vmatpush1.msra.mxu0 %v114
  %142 = vmatprep.subr.mxu0 0.0
  %143 = vmatpush1.msra.mxu0 %v113
  %144 = vmatprep.subr.mxu0 0.0
  %145 = vmatpush1.msra.mxu0 %v112
  %146 = vmatprep.subr.mxu0 0.0
  %147 = vmatpush1.msra.mxu0 %v111
  %148 = vmatprep.subr.mxu0 0.0
  %149 = vmatpush1.msra.mxu0 %v110
  %150 = vmatprep.subr.mxu0 0.0
  %151 = vmatpush1.msra.mxu0 %v109
  %152 = vmatprep.subr.mxu0 0.0
  %153 = vmatpush1.msra.mxu0 %v108
  %154 = vmatprep.subr.mxu0 0.0
  %155 = vmatpush1.msra.mxu0 %v107
  %156 = vmatprep.subr.mxu0 0.0
  %157 = vmatpush1.msra.mxu0 %v106
  %158 = vmatprep.subr.mxu0 0.0
  %159 = vmatpush1.msra.mxu0 %v105
  %160 = vmatprep.subr.mxu0 0.0
  %161 = vmatpush2.msra.mxu0 0.0
  %162 = vmatprep.subr.mxu0 0.0
  %163 = vmatpush2.msra.mxu0 0.0
  %164 = vmatprep.subr.mxu0 0.0
  %165 = vmatpush2.msra.mxu0 0.0
  %166 = vmatprep.subr.mxu0 0.0
  %167 = vmatpush2.msra.mxu0 0.0
  %168 = vmatprep.subr.mxu0 0.0
  %169 = vmatpush2.msra.mxu0 0.0
  %170 = vmatprep.subr.mxu0 0.0
  %171 = vmatpush2.msra.mxu0 0.0
  %172 = vmatprep.subr.mxu0 0.0
  %173 = vmatpush2.msra.mxu0 0.0
  %174 = vmatprep.subr.mxu0 0.0
  %175 = vmatpush2.msra.mxu0 0.0
  %176 = vmatprep.subr.mxu0 0.0
  %177 = vmatpush2.msra.mxu0 0.0
  %178 = vmatprep.subr.mxu0 0.0
  %179 = vmatpush2.msra.mxu0 0.0
  %180 = vmatprep.subr.mxu0 0.0
  %181 = vmatpush2.msra.mxu0 0.0
  %182 = vmatprep.subr.mxu0 0.0
  %183 = vmatpush2.msra.mxu0 0.0
  %184 = vmatprep.subr.mxu0 0.0
  %185 = vmatpush2.msra.mxu0 0.0
  %186 = vmatprep.subr.mxu0 0.0
  %187 = vmatpush2.msra.mxu0 0.0
  %188 = vmatprep.subr.mxu0 0.0
  %189 = vmatpush2.msra.mxu0 0.0
  %190 = vmatprep.subr.mxu0 0.0
  %191 = vmatpush2.msra.mxu0 0.0
  %192 = vmatprep.mubr.f32.mxu0 0.0
  %193 = vmatmul.mubr.f32.gmra.mxu0 %v104
  %v194 = vpop.f32.mrf.mxu0
  %v195 = vadd.f32 %v126, %v194
  %v196 = vpop.f32.mrf.mxu0
  %197 = vdwg.mxu0
  %vm198 = vcmask 31744
  %199 = vst.msk [vmem:[%s5] sm:$0xff] %vm198, %v195
  // Predicated region
  $region22: #{tpu_custom_call.1} parent=0 // pred_check
    _
  $region23: #{tpu_custom_call.1} parent=0 // pred_check_branch
    %201 = sbr.rel (0) target = $region25
  $region24: #{tpu_custom_call.1} parent=0 // pred_region
    _
  $region25: #{tpu_custom_call.1} parent=0 // pred_fallthru
    _
  // Predicated region
  $region26: #{tpu_custom_call.1} parent=0 // pred_check
    _
  $region27: #{tpu_custom_call.1} parent=0 // pred_check_branch
    %203 = sbr.rel (0) target = $region29
  $region28: #{tpu_custom_call.1} parent=0 // pred_region
    _
  $region29: #{tpu_custom_call.1} parent=0 // pred_fallthru
    _

</llo_original>
